<compile_context>
chip_gen: v7x
topology: tpu7x:2x2x1
jax: 0.10.0
libtpu: 0.0.40
codegen_flags: <defaults>
</compile_context>

<pallas_src>
import functools

import jax
import jax.numpy as jnp
from jax.experimental import pallas as pl
from jax.experimental.pallas import tpu as pltpu


# TODO(synk): "gelu" here uses the tanh approximation (EUP tanh lowers cleanly
# in Mosaic); HF's exact erf-GELU differs by <~2e-3 elementwise.
_ACTIVATIONS = {
    "gelu": lambda x: jax.nn.gelu(x, approximate=True),
    "gelu_new": lambda x: jax.nn.gelu(x, approximate=True),
    "gelu_tanh": lambda x: jax.nn.gelu(x, approximate=True),
    "relu": jax.nn.relu,
    "silu": jax.nn.silu,
    "swish": jax.nn.silu,
    "tanh": jnp.tanh,
}


def _round_up(x, m):
    return (x + m - 1) // m * m


def _intermediate_kernel(x_ref, w_ref, b_ref, o_ref, *, act_fn):
    # Single fused matmul on the MXU; f32 accumulation.
    y = jnp.dot(x_ref[...], w_ref[...], preferred_element_type=jnp.float32)
    y = y + b_ref[...].astype(jnp.float32)        # (1, dout) broadcast
    y = act_fn(y)                                 # activation epilogue in f32
    o_ref[...] = y.astype(o_ref.dtype)


def prepare_fused_params(w1, b1, w2, b2):
    """Fuse the two Linear layers once at param-prep time.

    w1: (input_dim, output_dim1), w2: (input_dim, output_dim2)
    (weights already stored transposed, i.e. (in, out)).
    Returns W: (input_dim, output_dim1+output_dim2), b: (1, dout).
    """
    w = jnp.concatenate([w1, w2], axis=1)
    b = jnp.concatenate([b1.reshape(-1), b2.reshape(-1)]).reshape(1, -1)
    return w, b


def split_sub_bert_intermediate(hidden_states, w, b, *, hidden_act="gelu",
                                tile_m=256):
    """hidden_states: [..., input_dim]; w: [input_dim, dout]; b: [1, dout]."""
    act_fn = _ACTIVATIONS[hidden_act] if isinstance(hidden_act, str) else hidden_act

    orig_shape = hidden_states.shape
    d_in = orig_shape[-1]
    d_out = w.shape[1]

    x = hidden_states.reshape(-1, d_in)
    M = x.shape[0]

    # Large row tile for MXU / pipeline efficiency, clamped to (padded) M.
    tile = min(tile_m, _round_up(M, 8))
    m_padded = _round_up(M, tile)
    if m_padded != M:
        x = jnp.pad(x, ((0, m_padded - M), (0, 0)))
    grid = (m_padded // tile,)

    act_bytes = jnp.dtype(x.dtype).itemsize
    w_bytes = jnp.dtype(w.dtype).itemsize
    # VMEM budget: double-buffered x/out tiles + resident (double-buffered)
    # weights/bias + slack; capped so the same config fits v7x's 64 MiB VMEM.
    vmem_bytes = (2 * tile * d_in * act_bytes
                  + 2 * tile * d_out * act_bytes
                  + 2 * (d_in * d_out + d_out) * w_bytes
                  + (4 << 20))
    vmem_bytes = int(min(max(vmem_bytes, 16 << 20), 48 << 20))

    cost = pl.CostEstimate(
        flops=2 * M * d_in * d_out,
        transcendentals=M * d_out,
        bytes_accessed=(M * d_in + M * d_out) * act_bytes
                       + (d_in * d_out + d_out) * w_bytes,
    )

    kernel = functools.partial(_intermediate_kernel, act_fn=act_fn)

    out = pl.pallas_call(
        kernel,
        out_shape=jax.ShapeDtypeStruct((m_padded, d_out), hidden_states.dtype),
        grid_spec=pltpu.PrefetchScalarGridSpec(
            num_scalar_prefetch=0,
            grid=grid,
            in_specs=[
                pl.BlockSpec((tile, d_in), lambda i: (i, 0)),    # activation tile
                pl.BlockSpec((d_in, d_out), lambda i: (0, 0)),   # fused W (resident)
                pl.BlockSpec((1, d_out), lambda i: (0, 0)),      # fused bias
            ],
            out_specs=pl.BlockSpec((tile, d_out), lambda i: (i, 0)),
        ),
        compiler_params=pltpu.CompilerParams(
            dimension_semantics=("parallel",),
            vmem_limit_bytes=vmem_bytes,
        ),
        cost_estimate=cost,
    )(x, w, b)

    if m_padded != M:
        out = out[:M]
    return out.reshape(*orig_shape[:-1], d_out)


def _reference(hidden_states, w1, b1, w2, b2, act_fn):
    x = hidden_states.astype(jnp.float32)
    h1 = act_fn(x @ w1.astype(jnp.float32) + b1.astype(jnp.float32))
    h2 = act_fn(x @ w2.astype(jnp.float32) + b2.astype(jnp.float32))
    return jnp.concatenate([h1, h2], axis=-1)


if __name__ == "__main__":
    # Small shapes consistent with the module; dout = 128+128 = 256 (lane-dense).
    batch, seq = 2, 8
    input_dim, output_dim1, output_dim2 = 128, 128, 128
    hidden_act = "gelu"

    key = jax.random.PRNGKey(0)
    k_x, k_w1, k_w2, k_b1, k_b2 = jax.random.split(key, 5)

    hidden_states = jax.random.normal(
        k_x, (batch, seq, input_dim), dtype=jnp.float32)

    # nn.Linear params, weights stored pre-transposed to (in, out).
    w1 = jax.random.normal(k_w1, (input_dim, output_dim1), jnp.float32) * 0.05
    w2 = jax.random.normal(k_w2, (input_dim, output_dim2), jnp.float32) * 0.05
    b1 = jax.random.normal(k_b1, (output_dim1,), jnp.float32) * 0.05
    b2 = jax.random.normal(k_b2, (output_dim2,), jnp.float32) * 0.05

    # One-time param fusion: W = [W1 | W2], b = [b1 ; b2].
    w, b = prepare_fused_params(w1, b1, w2, b2)

    out = split_sub_bert_intermediate(
        hidden_states, w, b, hidden_act=hidden_act, tile_m=256)
    out = jax.block_until_ready(out)

    ref = _reference(hidden_states, w1, b1, w2, b2, _ACTIVATIONS[hidden_act])
    assert out.shape == (batch, seq, output_dim1 + output_dim2)
    assert jnp.allclose(out, ref, atol=1e-4, rtol=1e-4), "mismatch vs reference"

    print("KERNEL_OK")
</pallas_src>

<mosaic_0001>
module attributes {stable_mosaic.version = 11 : i64} {
  func.func @_intermediate_kernel(%arg0: i32, %arg1: memref<16x128xf32, #tpu.memory_space<vmem>>, %arg2: memref<128x256xf32, #tpu.memory_space<vmem>>, %arg3: memref<1x256xf32, #tpu.memory_space<vmem>>, %arg4: memref<16x256xf32, #tpu.memory_space<vmem>>) attributes {dimension_semantics = [#tpu.dimension_semantics<parallel>], iteration_bounds = array<i64: 1>, scalar_prefetch = 0 : i64, scratch_operands = 0 : i64, tpu.core_type = #tpu.core_type<tc>, window_params = [{transform_indices = @transform_0, window_bounds = array<i64: 16, 128>}, {pipeline_mode = #tpu.pipeline_mode<synchronous>, transform_indices = @transform_1, window_bounds = array<i64: 128, 256>}, {pipeline_mode = #tpu.pipeline_mode<synchronous>, transform_indices = @transform_2, window_bounds = array<i64: 1, 256>}, {transform_indices = @transform_3, window_bounds = array<i64: 16, 256>}]} {
    %c0 = arith.constant 0 : index
    %c0_0 = arith.constant 0 : index
    %0 = vector.load %arg1[%c0, %c0_0] : memref<16x128xf32, #tpu.memory_space<vmem>>, vector<16x128xf32>
    %c0_1 = arith.constant 0 : index
    %c0_2 = arith.constant 0 : index
    %1 = vector.load %arg2[%c0_1, %c0_2] : memref<128x256xf32, #tpu.memory_space<vmem>>, vector<128x256xf32>
    %cst = arith.constant dense<0.000000e+00> : vector<16x256xf32>
    %2 = tpu.matmul %0, %1, %cst {dimension_numbers = #tpu.dot_dimension_numbers<[1], [0], [0], [1], [0, 0, 1, 1], [], []>} : vector<16x128xf32>, vector<128x256xf32>, vector<16x256xf32> -> vector<16x256xf32>
    %c0_3 = arith.constant 0 : index
    %c0_4 = arith.constant 0 : index
    %3 = vector.load %arg3[%c0_3, %c0_4] : memref<1x256xf32, #tpu.memory_space<vmem>>, vector<1x256xf32>
    %4 = vector.broadcast %3 : vector<1x256xf32> to vector<16x256xf32>
    %5 = arith.addf %2, %4 : vector<16x256xf32>
    %6 = arith.mulf %5, %5 : vector<16x256xf32>
    %7 = arith.mulf %5, %6 : vector<16x256xf32>
    %cst_5 = arith.constant 4.471500e-02 : f32
    %8 = vector.broadcast %cst_5 : f32 to vector<16x256xf32>
    %9 = arith.mulf %8, %7 : vector<16x256xf32>
    %10 = arith.addf %5, %9 : vector<16x256xf32>
    %cst_6 = arith.constant 0.797884583 : f32
    %11 = vector.broadcast %cst_6 : f32 to vector<16x256xf32>
    %12 = arith.mulf %11, %10 : vector<16x256xf32>
    %13 = math.tanh %12 : vector<16x256xf32>
    %cst_7 = arith.constant 1.000000e+00 : f32
    %14 = vector.broadcast %cst_7 : f32 to vector<16x256xf32>
    %15 = arith.addf %14, %13 : vector<16x256xf32>
    %cst_8 = arith.constant 5.000000e-01 : f32
    %16 = vector.broadcast %cst_8 : f32 to vector<16x256xf32>
    %17 = arith.mulf %16, %15 : vector<16x256xf32>
    %18 = arith.mulf %5, %17 : vector<16x256xf32>
    %c0_9 = arith.constant 0 : index
    %c0_10 = arith.constant 0 : index
    %19 = vector.load %arg4[%c0_9, %c0_10] : memref<16x256xf32, #tpu.memory_space<vmem>>, vector<16x256xf32>
    tpu.vector_store %arg4[%c0_9, %c0_10], %18 {strides = array<i32>} : memref<16x256xf32, #tpu.memory_space<vmem>>, vector<16x256xf32>,
    return
  }
  func.func @transform_0(%arg0: i32) -> (i32, i32) {
    %c0_i32 = arith.constant 0 : i32
    %c0_i32_0 = arith.constant 0 : i32
    return %arg0, %c0_i32 : i32, i32
  }
  func.func @transform_1(%arg0: i32) -> (i32, i32) {
    %c0_i32 = arith.constant 0 : i32
    %c0_i32_0 = arith.constant 0 : i32
    %c0_i32_1 = arith.constant 0 : i32
    return %c0_i32, %c0_i32_0 : i32, i32
  }
  func.func @transform_2(%arg0: i32) -> (i32, i32) {
    %c0_i32 = arith.constant 0 : i32
    %c0_i32_0 = arith.constant 0 : i32
    %c0_i32_1 = arith.constant 0 : i32
    return %c0_i32, %c0_i32_0 : i32, i32
  }
  func.func @transform_3(%arg0: i32) -> (i32, i32) {
    %c0_i32 = arith.constant 0 : i32
    %c0_i32_0 = arith.constant 0 : i32
    return %arg0, %c0_i32 : i32, i32
  }
}

</mosaic_0001>

<llo_original>
// kernel: tpu_custom_call.1
$region0: #{tpu_custom_call.1}
  #allocation0 [shape = 'u32[]', space=smem, size = 0x4, offset = 0x4, fixed_abs, tag = 'smem constant byte address 0x4 - core index']
  #allocation1 [shape = 'u32[144,128]{1,0:T(1,128)}', space=vmem, size = 0x12000, scoped, tag = 'internal scratch']
  %s0 = inlined_call_operand.hbm [shape: f32[16,128], index: 0, kind: input, shape index: {}]
  %s1 = inlined_call_operand.hbm [shape: f32[128,256], index: 1, kind: input, shape index: {}]
  %s2 = inlined_call_operand.vmem [shape: f32[1,256], index: 2, kind: input, shape index: {}]
  %s3 = inlined_call_operand.hbm [shape: f32[16,256], index: 3, kind: output, shape index: {}]
  %s4 = sld [smem:[#allocation0]]
  $region30: #{tpu_custom_call.1} parent=0
    _
  %s6 = ssub.s32 1, %s4
  %s7 = scalar_select 0, %s6, %s4
  $region1: #{tpu_custom_call.1} parent=0
    #allocation2 [shape = 'u8[8192]{0}', space=vmem, size = 0x2000, scoped, tag = 'input window, operand 0, single buffered']
    #allocation3 [shape = 's32[1]{0}', space=sflag, size = 0x4, scoped, tag = 'scoped memory for tpu_custom_call.1']
    #allocation4 [shape = 's32[1]{0}', space=sflag, size = 0x4, scoped, tag = 'scoped memory for tpu_custom_call.1']
    #allocation5 [shape = 'u8[131072]{0}', space=vmem, size = 0x20000, scoped, tag = 'input window, operand 1, single buffered']
    #allocation6 [shape = 's32[1]{0}', space=sflag, size = 0x4, scoped, tag = 'scoped memory for tpu_custom_call.1']
    #allocation7 [shape = 'u8[16384]{0}', space=vmem, size = 0x4000, scoped, tag = 'output window, operand 0, single buffered']
    %8 = vsyncpa [#allocation3], 0
    %9 = vsyncpa [#allocation6], 0
    %10 = vsyncpa [#allocation4], 0
    // Predicated region
    $region2: #{tpu_custom_call.1} parent=1 // pred_check
      _
    $region3: #{tpu_custom_call.1} parent=1 // pred_check_branch
      %12 = sbr.rel (0) target = $region5
    $region4: #{tpu_custom_call.1} parent=1 // pred_region
      %s14 = ssub.s32 256, 256
      %15 = vsyncadd [#allocation3], %s14
      %s16 = sshll.u32 [#allocation2], 4
      %s17 = int_to_ptr.vmem [resolvable:$true] %s16
      %22 = dma.hbm_to_vmem [thread:$0]  %s0, 256, %s17, [#allocation3], 128, 128, 8
    $region5: #{tpu_custom_call.1} parent=1 // pred_fallthru
      _
    // Predicated region
    $region6: #{tpu_custom_call.1} parent=1 // pred_check
      _
    $region7: #{tpu_custom_call.1} parent=1 // pred_check_branch
      %24 = sbr.rel (0) target = $region9
    $region8: #{tpu_custom_call.1} parent=1 // pred_region
      %s26 = ssub.s32 4096, 4096
      %27 = vsyncadd [#allocation6], %s26
      %s28 = sshll.u32 [#allocation5], 4
      %s29 = int_to_ptr.vmem [resolvable:$true] %s28
      %34 = dma.hbm_to_vmem [thread:$0]  %s1, 4096, %s29, [#allocation6], 256, 256, 16
    $region9: #{tpu_custom_call.1} parent=1 // pred_fallthru
      _
    // Predicated region
    $region10: #{tpu_custom_call.1} parent=1 // pred_check
      _
    $region11: #{tpu_custom_call.1} parent=1 // pred_check_branch
      %36 = sbr.rel (0) target = $region13
    $region12: #{tpu_custom_call.1} parent=1 // pred_region
      _
    $region13: #{tpu_custom_call.1} parent=1 // pred_fallthru
      _
    // Predicated region
    $region14: #{tpu_custom_call.1} parent=1 // pred_check
      _
    $region15: #{tpu_custom_call.1} parent=1 // pred_check_branch
      %38 = sbr.rel (0) target = $region17
    $region16: #{tpu_custom_call.1} parent=1 // pred_region
      %39 = dma.done [#allocation3], 256
    $region17: #{tpu_custom_call.1} parent=1 // pred_fallthru
      _
    // Predicated region
    $region18: #{tpu_custom_call.1} parent=1 // pred_check
      _
    $region19: #{tpu_custom_call.1} parent=1 // pred_check_branch
      %41 = sbr.rel (0) target = $region21
    $region20: #{tpu_custom_call.1} parent=1 // pred_region
      %42 = dma.done [#allocation6], 4096
    $region21: #{tpu_custom_call.1} parent=1 // pred_fallthru
      _
    %v43 = vld [vmem:[#allocation2] sm:$0xff]
    %v44 = vld [vmem:[#allocation2 + $0x8] sm:$0xff]
    %v45 = vld [vmem:[#allocation5] sm:$0xff]
    %v46 = vld [vmem:[#allocation5 + $0x8] sm:$0xff]
    %v47 = vld [vmem:[#allocation5 + $0x10] sm:$0xff]
    %v48 = vld [vmem:[#allocation5 + $0x18] sm:$0xff]
    %v49 = vld [vmem:[#allocation5 + $0x20] sm:$0xff]
    %v50 = vld [vmem:[#allocation5 + $0x28] sm:$0xff]
    %v51 = vld [vmem:[#allocation5 + $0x30] sm:$0xff]
    %v52 = vld [vmem:[#allocation5 + $0x38] sm:$0xff]
    %v53 = vld [vmem:[#allocation5 + $0x40] sm:$0xff]
    %v54 = vld [vmem:[#allocation5 + $0x48] sm:$0xff]
    %v55 = vld [vmem:[#allocation5 + $0x50] sm:$0xff]
    %v56 = vld [vmem:[#allocation5 + $0x58] sm:$0xff]
    %v57 = vld [vmem:[#allocation5 + $0x60] sm:$0xff]
    %v58 = vld [vmem:[#allocation5 + $0x68] sm:$0xff]
    %v59 = vld [vmem:[#allocation5 + $0x70] sm:$0xff]
    %v60 = vld [vmem:[#allocation5 + $0x78] sm:$0xff]
    %v61 = vld [vmem:[#allocation5 + $0x80] sm:$0xff]
    %v62 = vld [vmem:[#allocation5 + $0x88] sm:$0xff]
    %v63 = vld [vmem:[#allocation5 + $0x90] sm:$0xff]
    %v64 = vld [vmem:[#allocation5 + $0x98] sm:$0xff]
    %v65 = vld [vmem:[#allocation5 + $0xa0] sm:$0xff]
    %v66 = vld [vmem:[#allocation5 + $0xa8] sm:$0xff]
    %v67 = vld [vmem:[#allocation5 + $0xb0] sm:$0xff]
    %v68 = vld [vmem:[#allocation5 + $0xb8] sm:$0xff]
    %v69 = vld [vmem:[#allocation5 + $0xc0] sm:$0xff]
    %v70 = vld [vmem:[#allocation5 + $0xc8] sm:$0xff]
    %v71 = vld [vmem:[#allocation5 + $0xd0] sm:$0xff]
    %v72 = vld [vmem:[#allocation5 + $0xd8] sm:$0xff]
    %v73 = vld [vmem:[#allocation5 + $0xe0] sm:$0xff]
    %v74 = vld [vmem:[#allocation5 + $0xe8] sm:$0xff]
    %v75 = vld [vmem:[#allocation5 + $0xf0] sm:$0xff]
    %v76 = vld [vmem:[#allocation5 + $0xf8] sm:$0xff]
    %v77 = vld [vmem:[%s2] sm:$0x3]
    %v79 = vlaneseq
    %v80 = vshrl.u32 %v79, 7
    %v81 = vsub.s32 0, %v80
    %v82 = vrot.slane %v77, %v81
    %v83 = vlaneseq
    %v84 = vshrl.u32 %v83, 7
    %v85 = vsub.s32 1, %v84
    %v86 = vrot.slane %v77, %v85
    %89 = vmatprep.subr.mxu0 %v46
    %90 = vmatpush1.msra.mxu0 %v45
    %91 = vmatprep.subr.mxu0 %v48
    %92 = vmatpush1.msra.mxu0 %v47
    %93 = vmatprep.subr.mxu0 %v50
    %94 = vmatpush1.msra.mxu0 %v49
    %95 = vmatprep.subr.mxu0 %v52
    %96 = vmatpush1.msra.mxu0 %v51
    %97 = vmatprep.subr.mxu0 %v54
    %98 = vmatpush1.msra.mxu0 %v53
    %99 = vmatprep.subr.mxu0 %v56
    %100 = vmatpush1.msra.mxu0 %v55
    %101 = vmatprep.subr.mxu0 %v58
    %102 = vmatpush1.msra.mxu0 %v57
    %103 = vmatprep.subr.mxu0 %v60
    %104 = vmatpush1.msra.mxu0 %v59
    %105 = vmatprep.subr.mxu0 %v62
    %106 = vmatpush1.msra.mxu0 %v61
    %107 = vmatprep.subr.mxu0 %v64
    %108 = vmatpush1.msra.mxu0 %v63
    %109 = vmatprep.subr.mxu0 %v66
    %110 = vmatpush1.msra.mxu0 %v65
    %111 = vmatprep.subr.mxu0 %v68
    %112 = vmatpush1.msra.mxu0 %v67
    %113 = vmatprep.subr.mxu0 %v70
    %114 = vmatpush1.msra.mxu0 %v69
    %115 = vmatprep.subr.mxu0 %v72
    %116 = vmatpush1.msra.mxu0 %v71
    %117 = vmatprep.subr.mxu0 %v74
    %118 = vmatpush1.msra.mxu0 %v73
    %119 = vmatprep.subr.mxu0 %v76
    %120 = vmatpush1.msra.mxu0 %v75
    %121 = vmatprep.subr.mxu0 0.0
    %122 = vmatpush1.msra.mxu0 0.0
    %123 = vmatprep.subr.mxu0 0.0
    %124 = vmatpush1.msra.mxu0 0.0
    %125 = vmatprep.subr.mxu0 0.0
    %126 = vmatpush1.msra.mxu0 0.0
    %127 = vmatprep.subr.mxu0 0.0
    %128 = vmatpush1.msra.mxu0 0.0
    %129 = vmatprep.subr.mxu0 0.0
    %130 = vmatpush1.msra.mxu0 0.0
    %131 = vmatprep.subr.mxu0 0.0
    %132 = vmatpush1.msra.mxu0 0.0
    %133 = vmatprep.subr.mxu0 0.0
    %134 = vmatpush1.msra.mxu0 0.0
    %135 = vmatprep.subr.mxu0 0.0
    %136 = vmatpush1.msra.mxu0 0.0
    %137 = vmatprep.subr.mxu0 0.0
    %138 = vmatpush1.msra.mxu0 0.0
    %139 = vmatprep.subr.mxu0 0.0
    %140 = vmatpush1.msra.mxu0 0.0
    %141 = vmatprep.subr.mxu0 0.0
    %142 = vmatpush1.msra.mxu0 0.0
    %143 = vmatprep.subr.mxu0 0.0
    %144 = vmatpush1.msra.mxu0 0.0
    %145 = vmatprep.subr.mxu0 0.0
    %146 = vmatpush1.msra.mxu0 0.0
    %147 = vmatprep.subr.mxu0 0.0
    %148 = vmatpush1.msra.mxu0 0.0
    %149 = vmatprep.subr.mxu0 0.0
    %150 = vmatpush1.msra.mxu0 0.0
    %151 = vmatprep.subr.mxu0 0.0
    %152 = vmatpush1.msra.mxu0 0.0
    %153 = vmatprep.mubr.f32.mxu0 0.0
    %154 = vmatmul.mubr.f32.gmra.mrb[0].mxu0 %v43
    %v155 = vpop.f32.mrb[0].mxu0
    %v156 = vadd.f32 %v82, %v155
    %v157 = vpop.f32.mrb[0].mxu0
    %v158 = vadd.f32 %v86, %v157
    %159 = vmatprep.mubr.f32.mxu0 0.0
    %160 = vmatmul.mubr.f32.gmra.mrb[0].mxu0 %v44
    %v161 = vpop.f32.mrb[0].mxu0
    %v162 = vadd.f32 %v82, %v161
    %v163 = vpop.f32.mrb[0].mxu0
    %v164 = vadd.f32 %v86, %v163
    %165 = vdwg.mxu0
    %v166 = vmul.f32 %v156, %v156
    %v167 = vmul.f32 %v158, %v158
    %v168 = vmul.f32 %v162, %v162
    %v169 = vmul.f32 %v164, %v164
    %v170 = vmul.f32 %v156, %v166
    %v171 = vmul.f32 %v158, %v167
    %v172 = vmul.f32 %v162, %v168
    %v173 = vmul.f32 %v164, %v169
    %v174 = vmul.f32 %v170, 0.044715
    %v175 = vmul.f32 %v171, 0.044715
    %v176 = vmul.f32 %v172, 0.044715
    %v177 = vmul.f32 %v173, 0.044715
    %v178 = vadd.f32 %v156, %v174
    %v179 = vadd.f32 %v158, %v175
    %v180 = vadd.f32 %v162, %v176
    %v181 = vadd.f32 %v164, %v177
    %v182 = vmul.f32 %v178, 0.7978846
    %v183 = vmul.f32 %v179, 0.7978846
    %v184 = vmul.f32 %v180, 0.7978846
    %v185 = vmul.f32 %v181, 0.7978846
    %v186 = vtanh.pop %v182
    %v187 = vtanh.pop %v183
    %v188 = vtanh.pop %v184
    %v189 = vtanh.pop %v185
    %v190 = vadd.f32 %v186, 1.0
    %v191 = vadd.f32 %v187, 1.0
    %v192 = vadd.f32 %v188, 1.0
    %v193 = vadd.f32 %v189, 1.0
    %v194 = vmul.f32 %v190, 0.5
    %v195 = vmul.f32 %v191, 0.5
    %v196 = vmul.f32 %v192, 0.5
    %v197 = vmul.f32 %v193, 0.5
    %v198 = vmul.f32 %v156, %v194
    %v199 = vmul.f32 %v158, %v195
    %v200 = vmul.f32 %v162, %v196
    %v201 = vmul.f32 %v164, %v197
    %202 = vst [vmem:[#allocation7] sm:$0xff] %v198
    %203 = vst [vmem:[#allocation7 + $0x8] sm:$0xff] %v199
    %204 = vst [vmem:[#allocation7 + $0x10] sm:$0xff] %v200
    %205 = vst [vmem:[#allocation7 + $0x18] sm:$0xff] %v201
    // Predicated region
    $region22: #{tpu_custom_call.1} parent=1 // pred_check
      _
    $region23: #{tpu_custom_call.1} parent=1 // pred_check_branch
      %207 = sbr.rel (0) target = $region25
    $region24: #{tpu_custom_call.1} parent=1 // pred_region
      %s209 = ssub.s32 512, 512
      %210 = vsyncadd [#allocation4], %s209
      %s211 = sshll.u32 [#allocation7], 4
      %s212 = int_to_ptr.vmem [resolvable:$true] %s211
      %217 = dma.vmem_to_hbm [thread:$0]  %s212, 512, %s3, [#allocation4], 256, 256, 16
    $region25: #{tpu_custom_call.1} parent=1 // pred_fallthru
      _
    // Predicated region
    $region26: #{tpu_custom_call.1} parent=1 // pred_check
      _
    $region27: #{tpu_custom_call.1} parent=1 // pred_check_branch
      %219 = sbr.rel (0) target = $region29
    $region28: #{tpu_custom_call.1} parent=1 // pred_region
      %220 = dma.done [#allocation4], 512
    $region29: #{tpu_custom_call.1} parent=1 // pred_fallthru
      _
    %221 = vsyncpa [#allocation3], 1
    %222 = vsyncpa [#allocation6], 1
    %223 = vsyncpa [#allocation4], 1

</llo_original>
